<compile_context>
chip_gen: v7x
topology: tpu7x:2x2x1
jax: 0.10.0
libtpu: 0.0.40
codegen_flags: <defaults>
</compile_context>

<pallas_src>
import functools

import jax
import jax.numpy as jnp
from jax.experimental import pallas as pl
from jax.experimental.pallas import tpu as pltpu


def _sdpa_kernel(q_ref, k_ref, v_ref, ctx_ref, att_ref, *, scale, chunk):
    """One (batch, q-tile) grid step.

    q block:   (1, TQ, D)
    k/v block: (1, Lk, D)  -- same block for every q-tile of a batch, so the
                              pipeline keeps them VMEM-resident (no re-DMA).
    ctx block: (1, TQ, D)
    att block: (1, TQ, Lk) -- lane-dense store when Lk % 128 == 0.
    """
    tq = q_ref.shape[1]
    lk = k_ref.shape[1]
    d = q_ref.shape[2]
    n_chunks = lk // chunk  # static Python int (wrapper guarantees divisibility)

    q = q_ref[0]

    def scores(c):
        # QK^T on the MXU, native-dtype operands, f32 accumulation.
        # TODO(synk): if the bundle dump shows a per-step vxpose of the k tile,
        # transpose k once per batch into a VMEM scratch under
        # @pl.when(pl.program_id(1) == 0) instead.
        kc = k_ref[0, c * chunk:(c + 1) * chunk, :]
        s = jax.lax.dot_general(
            q, kc,
            dimension_numbers=(((1,), (1,)), ((), ())),
            preferred_element_type=jnp.float32,
        )
        if scale is not None:
            # Apply scale to the f32 scores (exact; VPU slack hides it in this
            # HBM-writeback-bound kernel) instead of folding into low-precision q.
            s = s * scale
        return s

    # dropout(p=0.0) is the identity.
    # TODO(synk): support att_dropout > 0.0 via pltpu.prng_seed / prng_random_bits.

    if n_chunks == 1:
        # Single pass: the whole (TQ, Lk) score tile stays live.
        s = scores(0)
        m = jnp.max(s, axis=-1, keepdims=True)
        p = jnp.exp(s - m)
        denom = jnp.sum(p, axis=-1, keepdims=True)
        att = p * (1.0 / denom)                       # exact softmax normalization
        att_lp = att.astype(v_ref.dtype)              # single cast, reused below
        ctx = jnp.dot(att_lp, v_ref[0], preferred_element_type=jnp.float32)
        att_ref[0] = att_lp if att_ref.dtype == att_lp.dtype else att.astype(att_ref.dtype)
        ctx_ref[0] = ctx.astype(ctx_ref.dtype)
    else:
        # Two-pass chunked softmax: f32 intermediates live at (TQ, chunk) while
        # k/v stay VMEM-resident. Pass 2 uses the final row stats, so the
        # written attention is the exact softmax (no flash-style rescaling).
        neg_big = jnp.float32(-1e30)
        m = jnp.full((tq, 1), neg_big, dtype=jnp.float32)
        denom = jnp.zeros((tq, 1), dtype=jnp.float32)
        for c in range(n_chunks):                     # static unroll
            s_c = scores(c)
            m_new = jnp.maximum(m, jnp.max(s_c, axis=-1, keepdims=True))
            denom = denom * jnp.exp(m - m_new) + jnp.sum(
                jnp.exp(s_c - m_new), axis=-1, keepdims=True)
            m = m_new
        inv = 1.0 / denom                             # exact
        acc = jnp.zeros((tq, d), dtype=jnp.float32)
        for c in range(n_chunks):                     # static unroll
            s_c = scores(c)
            att_c = jnp.exp(s_c - m) * inv
            att_lp = att_c.astype(v_ref.dtype)
            att_ref[0, :, c * chunk:(c + 1) * chunk] = (
                att_lp if att_ref.dtype == att_lp.dtype else att_c.astype(att_ref.dtype))
            acc = acc + jnp.dot(att_lp, v_ref[0, c * chunk:(c + 1) * chunk, :],
                                preferred_element_type=jnp.float32)
        ctx_ref[0] = acc.astype(ctx_ref.dtype)


def _vmem_capacity_bytes():
    """Physical VMEM per core (generation-aware); conservative v7x fallback."""
    try:
        info = pltpu.get_tpu_info()
        cap = getattr(info, "vmem_capacity_bytes", None)
        if cap:
            return int(cap)
    except Exception:
        pass
    return 64 << 20  # v7x-sized fallback: safe on every generation


def _plan_tiles(lq, lk, d, itm, att_itm, vmem_cap, lk_chunk=None):
    """Pick (query tile, Lk softmax chunk) so the working set fits ~45% of VMEM."""
    budget = int(0.45 * vmem_cap)
    fixed = 2 * 2 * lk * d * itm                  # k + v blocks (double-buffered)

    def tile_bytes(tq, chunk):
        return (2 * tq * d * itm                  # q block (double-buffered)
                + 2 * tq * d * itm                # ctx block
                + 2 * tq * lk * att_itm           # att out block
                + 2 * tq * chunk * 4              # live f32 score/prob chunk
                + tq * d * 4)                     # f32 ctx accumulator

    tq_cands = [t for t in (512, 256, 128, 64, 32, 16, 8) if t <= lq and lq % t == 0]
    if not tq_cands:
        tq_cands = [lq]                           # full-extent block (allowed)
    if lk_chunk is not None and 0 < lk_chunk <= lk and lk % lk_chunk == 0:
        chunk_cands = [lk_chunk]
    else:
        # Prefer single pass; fall back to 128-aligned chunks (lane-dense stores).
        chunk_cands = [lk] + [c for c in (1024, 512, 256, 128) if c < lk and lk % c == 0]

    for tq in tq_cands:                           # largest tq first
        for chunk in chunk_cands:                 # single pass first
            if fixed + tile_bytes(tq, chunk) <= budget:
                return tq, chunk
    # TODO(synk): for Lk so long that k/v residency alone blows VMEM, stream
    # k/v over an extra ("arbitrary") grid axis instead of keeping them resident.
    return tq_cands[-1], chunk_cands[-1]


def scaled_dot_product_attention(q, k, v, scale=None, att_dropout=0.0,
                                 att_dtype=None, lk_chunk=None):
    """Pallas-TPU forward of the PyTorch module. Returns (context, attention)."""
    assert att_dropout == 0.0, "dropout > 0 not implemented"
    B, Lq, D = q.shape
    Bk, Lk, Dk = k.shape
    assert B == Bk and D == Dk and v.shape == (B, Lk, D)

    # `scale` must be a static Python number; `if scale:` mirrors the module's
    # truthiness (scale=None or 0.0 silently skips the multiply, like PyTorch).
    scale_val = float(scale) if scale else None

    # Attention returned in the input dtype (PyTorch parity); opt-in narrower
    # dtype (e.g. bf16 on v5e) halves the dominant HBM writeback stream.
    att_dtype = q.dtype if att_dtype is None else jnp.dtype(att_dtype)
    itm = jnp.dtype(q.dtype).itemsize
    att_itm = jnp.dtype(att_dtype).itemsize

    vmem_cap = _vmem_capacity_bytes()
    tq, chunk = _plan_tiles(Lq, Lk, D, itm, att_itm, vmem_cap, lk_chunk=lk_chunk)
    # v7x megacore: a single-batch, single-tile problem would otherwise run on
    # one TensorCore; split the q axis so >= 2 grid points exist.
    if B == 1 and Lq // tq == 1 and Lq >= 16 and (Lq // 2) % 8 == 0:
        tq = Lq // 2
    n_q = Lq // tq

    kernel = functools.partial(_sdpa_kernel, scale=scale_val, chunk=chunk)

    out_shapes = (
        jax.ShapeDtypeStruct((B, Lq, D), q.dtype),      # context
        jax.ShapeDtypeStruct((B, Lq, Lk), att_dtype),   # attention
    )

    grid_spec = pltpu.PrefetchScalarGridSpec(
        num_scalar_prefetch=0,
        grid=(B, n_q),
        in_specs=[
            pl.BlockSpec((1, tq, D), lambda b, i: (b, i, 0)),    # q (query-tiled)
            pl.BlockSpec((1, Lk, D), lambda b, i: (b, 0, 0)),    # k (resident per batch)
            pl.BlockSpec((1, Lk, D), lambda b, i: (b, 0, 0)),    # v (resident per batch)
        ],
        out_specs=[
            pl.BlockSpec((1, tq, D), lambda b, i: (b, i, 0)),    # ctx
            pl.BlockSpec((1, tq, Lk), lambda b, i: (b, i, 0)),   # att (dominant stream)
        ],
    )
    # NOTE: for best store bandwidth Lk should be a multiple of 128 (lane-dense
    # attention writeback); non-multiples still work, just with masked stores.

    # VMEM request: 2x double-buffered blocks + f32 intermediates + headroom,
    # capped generation-aware (<= 7/8 of physical: ~112 MiB v5e/v6e, ~56 MiB v7x).
    need = (4 * Lk * D * itm                     # k + v, double-buffered
            + 4 * tq * D * itm                   # q + ctx, double-buffered
            + 2 * tq * Lk * att_itm              # att out, double-buffered
            + 2 * tq * chunk * 4 + tq * D * 4    # f32 intermediates
            + (4 << 20))                         # headroom
    vmem_limit = int(min(max(need, 32 << 20), (vmem_cap * 7) // 8))

    passes = 1 if chunk == Lk else 2
    cost = pl.CostEstimate(
        flops=2 * B * Lq * Lk * D * (passes + 1),     # QK^T (x passes) + PV
        transcendentals=B * Lq * Lk * passes,         # exp
        bytes_accessed=(2 * B * Lq * D * itm          # q + ctx
                        + 2 * B * Lk * D * itm        # k + v
                        + B * Lq * Lk * att_itm),     # attention writeback (dominant)
    )

    context, attention = pl.pallas_call(
        kernel,
        out_shape=out_shapes,
        grid_spec=grid_spec,
        compiler_params=pltpu.CompilerParams(
            dimension_semantics=("parallel", "parallel"),
            vmem_limit_bytes=vmem_limit),
        cost_estimate=cost,
    )(q, k, v)
    return context, attention


def _reference(q, k, v, scale=None):
    att = jnp.einsum("ijk,ilk->ijl", q.astype(jnp.float32), k.astype(jnp.float32))
    if scale:
        att = att * scale
    att = jax.nn.softmax(att, axis=2)
    ctx = jnp.einsum("ijl,ilk->ijk", att, v.astype(jnp.float32))
    return ctx.astype(q.dtype), att.astype(q.dtype)


if __name__ == "__main__":
    def _mk(key, shape):
        # Round inputs to bf16-representable values so the comparison is
        # insensitive to the MXU's f32 matmul pass count (both kernel and
        # reference accumulate in f32).
        x = jax.random.normal(key, shape, dtype=jnp.float32)
        return x.astype(jnp.bfloat16).astype(jnp.float32)

    keys = jax.random.split(jax.random.PRNGKey(0), 6)

    # Small shapes consistent with the module: batch=2, seq=8, hidden=32.
    B, Lq, Lk, D = 2, 8, 8, 32
    q = _mk(keys[0], (B, Lq, D))
    k = _mk(keys[1], (B, Lk, D))
    v = _mk(keys[2], (B, Lk, D))
    scale = 1.0 / (D ** 0.5)

    ctx, att = scaled_dot_product_attention(q, k, v, scale=scale)
    jax.block_until_ready((ctx, att))
    ctx_r, att_r = _reference(q, k, v, scale=scale)
    assert jnp.allclose(att.astype(jnp.float32), att_r.astype(jnp.float32),
                        atol=1e-3, rtol=1e-3)
    assert jnp.allclose(ctx.astype(jnp.float32), ctx_r.astype(jnp.float32),
                        atol=5e-3, rtol=5e-3)
    assert jnp.allclose(jnp.sum(att.astype(jnp.float32), axis=2), 1.0, atol=1e-3)

    # Second case exercises q-tiling and the chunked two-pass softmax path.
    B2, Lq2, Lk2, D2 = 2, 64, 256, 128
    q2 = _mk(keys[3], (B2, Lq2, D2))
    k2 = _mk(keys[4], (B2, Lk2, D2))
    v2 = _mk(keys[5], (B2, Lk2, D2))
    scale2 = 1.0 / (D2 ** 0.5)

    ctx2, att2 = scaled_dot_product_attention(q2, k2, v2, scale=scale2, lk_chunk=128)
    jax.block_until_ready((ctx2, att2))
    ctx2_r, att2_r = _reference(q2, k2, v2, scale=scale2)
    assert jnp.allclose(att2.astype(jnp.float32), att2_r.astype(jnp.float32),
                        atol=1e-3, rtol=1e-3)
    assert jnp.allclose(ctx2.astype(jnp.float32), ctx2_r.astype(jnp.float32),
                        atol=5e-3, rtol=5e-3)
    assert jnp.allclose(jnp.sum(att2.astype(jnp.float32), axis=2), 1.0, atol=1e-3)

    print("KERNEL_OK")
</pallas_src>

<mosaic_0001>
module attributes {stable_mosaic.version = 11 : i64} {
  func.func @_sdpa_kernel(%arg0: i32, %arg1: i32, %arg2: memref<1x8x32xf32, #tpu.memory_space<vmem>>, %arg3: memref<1x8x32xf32, #tpu.memory_space<vmem>>, %arg4: memref<1x8x32xf32, #tpu.memory_space<vmem>>, %arg5: memref<1x8x32xf32, #tpu.memory_space<vmem>>, %arg6: memref<1x8x8xf32, #tpu.memory_space<vmem>>) attributes {dimension_semantics = [#tpu.dimension_semantics<parallel>, #tpu.dimension_semantics<parallel>], iteration_bounds = array<i64: 2, 1>, scalar_prefetch = 0 : i64, scratch_operands = 0 : i64, tpu.core_type = #tpu.core_type<tc>, window_params = [{transform_indices = @transform_0, window_bounds = array<i64: 1, 8, 32>}, {transform_indices = @transform_1, window_bounds = array<i64: 1, 8, 32>}, {transform_indices = @transform_2, window_bounds = array<i64: 1, 8, 32>}, {transform_indices = @transform_3, window_bounds = array<i64: 1, 8, 32>}, {transform_indices = @transform_4, window_bounds = array<i64: 1, 8, 8>}]} {
    %c0 = arith.constant 0 : index
    %c0_0 = arith.constant 0 : index
    %c0_1 = arith.constant 0 : index
    %0 = vector.load %arg2[%c0, %c0_0, %c0_1] : memref<1x8x32xf32, #tpu.memory_space<vmem>>, vector<1x8x32xf32>
    %1 = vector.shape_cast %0 : vector<1x8x32xf32> to vector<8x32xf32>
    %c0_2 = arith.constant 0 : index
    %c0_3 = arith.constant 0 : index
    %c0_4 = arith.constant 0 : index
    %2 = vector.load %arg3[%c0_2, %c0_3, %c0_4] : memref<1x8x32xf32, #tpu.memory_space<vmem>>, vector<1x8x32xf32>
    %3 = vector.shape_cast %2 : vector<1x8x32xf32> to vector<8x32xf32>
    %cst = arith.constant dense<0.000000e+00> : vector<8x8xf32>
    %4 = tpu.matmul %1, %3, %cst {dimension_numbers = #tpu.dot_dimension_numbers<[1], [1], [0], [0], [0, 0, 1, 0], [], []>} : vector<8x32xf32>, vector<8x32xf32>, vector<8x8xf32> -> vector<8x8xf32>
    %cst_5 = arith.constant 0.176776692 : f32
    %5 = vector.broadcast %cst_5 : f32 to vector<8x8xf32>
    %6 = arith.mulf %4, %5 : vector<8x8xf32>
    %cst_6 = arith.constant dense<0xFF800000> : vector<8xf32>
    %7 = vector.multi_reduction <maximumf>, %6, %cst_6 [1] : vector<8x8xf32> to vector<8xf32>
    %8 = vector.shape_cast %7 : vector<8xf32> to vector<8x1xf32>
    %9 = vector.broadcast %8 : vector<8x1xf32> to vector<8x8xf32>
    %10 = arith.subf %6, %9 : vector<8x8xf32>
    %11 = math.exp %10 : vector<8x8xf32>
    %cst_7 = arith.constant dense<0.000000e+00> : vector<8xf32>
    %12 = vector.multi_reduction <add>, %11, %cst_7 [1] : vector<8x8xf32> to vector<8xf32>
    %13 = vector.shape_cast %12 : vector<8xf32> to vector<8x1xf32>
    %cst_8 = arith.constant 1.000000e+00 : f32
    %14 = vector.broadcast %cst_8 : f32 to vector<8x1xf32>
    %15 = arith.divf %14, %13 : vector<8x1xf32>
    %16 = vector.broadcast %15 : vector<8x1xf32> to vector<8x8xf32>
    %17 = arith.mulf %11, %16 : vector<8x8xf32>
    %c0_9 = arith.constant 0 : index
    %c0_10 = arith.constant 0 : index
    %c0_11 = arith.constant 0 : index
    %18 = vector.load %arg4[%c0_9, %c0_10, %c0_11] : memref<1x8x32xf32, #tpu.memory_space<vmem>>, vector<1x8x32xf32>
    %19 = vector.shape_cast %18 : vector<1x8x32xf32> to vector<8x32xf32>
    %cst_12 = arith.constant dense<0.000000e+00> : vector<8x32xf32>
    %20 = tpu.matmul %17, %19, %cst_12 {dimension_numbers = #tpu.dot_dimension_numbers<[1], [0], [0], [1], [0, 0, 1, 1], [], []>} : vector<8x8xf32>, vector<8x32xf32>, vector<8x32xf32> -> vector<8x32xf32>
    %c0_13 = arith.constant 0 : index
    %c0_14 = arith.constant 0 : index
    %c0_15 = arith.constant 0 : index
    %21 = vector.load %arg6[%c0_13, %c0_14, %c0_15] : memref<1x8x8xf32, #tpu.memory_space<vmem>>, vector<1x8x8xf32>
    %22 = vector.shape_cast %21 : vector<1x8x8xf32> to vector<8x8xf32>
    %23 = vector.shape_cast %17 : vector<8x8xf32> to vector<1x8x8xf32>
    tpu.vector_store %arg6[%c0_13, %c0_14, %c0_15], %23 {strides = array<i32>} : memref<1x8x8xf32, #tpu.memory_space<vmem>>, vector<1x8x8xf32>,
    %c0_16 = arith.constant 0 : index
    %c0_17 = arith.constant 0 : index
    %c0_18 = arith.constant 0 : index
    %24 = vector.load %arg5[%c0_16, %c0_17, %c0_18] : memref<1x8x32xf32, #tpu.memory_space<vmem>>, vector<1x8x32xf32>
    %25 = vector.shape_cast %24 : vector<1x8x32xf32> to vector<8x32xf32>
    %26 = vector.shape_cast %20 : vector<8x32xf32> to vector<1x8x32xf32>
    tpu.vector_store %arg5[%c0_16, %c0_17, %c0_18], %26 {strides = array<i32>} : memref<1x8x32xf32, #tpu.memory_space<vmem>>, vector<1x8x32xf32>,
    return
  }
  func.func @transform_0(%arg0: i32, %arg1: i32) -> (i32, i32, i32) {
    %c0_i32 = arith.constant 0 : i32
    %c0_i32_0 = arith.constant 0 : i32
    return %arg0, %arg1, %c0_i32 : i32, i32, i32
  }
  func.func @transform_1(%arg0: i32, %arg1: i32) -> (i32, i32, i32) {
    %c0_i32 = arith.constant 0 : i32
    %c0_i32_0 = arith.constant 0 : i32
    %c0_i32_1 = arith.constant 0 : i32
    return %arg0, %c0_i32, %c0_i32_0 : i32, i32, i32
  }
  func.func @transform_2(%arg0: i32, %arg1: i32) -> (i32, i32, i32) {
    %c0_i32 = arith.constant 0 : i32
    %c0_i32_0 = arith.constant 0 : i32
    %c0_i32_1 = arith.constant 0 : i32
    return %arg0, %c0_i32, %c0_i32_0 : i32, i32, i32
  }
  func.func @transform_3(%arg0: i32, %arg1: i32) -> (i32, i32, i32) {
    %c0_i32 = arith.constant 0 : i32
    %c0_i32_0 = arith.constant 0 : i32
    return %arg0, %arg1, %c0_i32 : i32, i32, i32
  }
  func.func @transform_4(%arg0: i32, %arg1: i32) -> (i32, i32, i32) {
    %c0_i32 = arith.constant 0 : i32
    %c0_i32_0 = arith.constant 0 : i32
    return %arg0, %arg1, %c0_i32 : i32, i32, i32
  }
}

</mosaic_0001>

<llo_original>
// kernel: tpu_custom_call.1
$region0: #{tpu_custom_call.1}
  #allocation0 [shape = 'u32[]', space=smem, size = 0x4, offset = 0x4, fixed_abs, tag = 'smem constant byte address 0x4 - core index']
  #allocation1 [shape = 'u32[144,128]{1,0:T(1,128)}', space=vmem, size = 0x12000, scoped, tag = 'internal scratch']
  %s0 = inlined_call_operand.hbm [shape: f32[2,8,32], index: 0, kind: input, shape index: {}]
  %s1 = inlined_call_operand.hbm [shape: f32[2,8,32], index: 1, kind: input, shape index: {}]
  %s2 = inlined_call_operand.hbm [shape: f32[2,8,32], index: 2, kind: input, shape index: {}]
  %s3 = inlined_call_operand.hbm [shape: f32[2,8,32], index: 3, kind: output, shape index: {0}]
  %s4 = inlined_call_operand.hbm [shape: f32[2,8,8], index: 4, kind: output, shape index: {1}]
  %5 = xla_tuple %s3, %s4
  %s6 = sld [smem:[#allocation0]]
  $region65: #{tpu_custom_call.1} parent=0
    _
  %s8 = ssub.s32 1, %s6
  %s9 = scalar_select 0, %s8, %s6
  $region1: #{tpu_custom_call.1} parent=0
    #allocation2 [shape = 'u8[8192]{0}', space=vmem, size = 0x2000, scoped, tag = 'input window, operand 0']
    #allocation3 [shape = 's32[2]{0}', space=sflag, size = 0x8, scoped, tag = 'scoped memory for tpu_custom_call.1']
    #allocation4 [shape = 's32[2]{0}', space=sflag, size = 0x8, scoped, tag = 'scoped memory for tpu_custom_call.1']
    #allocation5 [shape = 'u8[8192]{0}', space=vmem, size = 0x2000, scoped, tag = 'input window, operand 1']
    #allocation6 [shape = 's32[2]{0}', space=sflag, size = 0x8, scoped, tag = 'scoped memory for tpu_custom_call.1']
    #allocation7 [shape = 'u8[8192]{0}', space=vmem, size = 0x2000, scoped, tag = 'input window, operand 2']
    #allocation8 [shape = 'u8[8192]{0}', space=vmem, size = 0x2000, scoped, tag = 'output window, operand 0']
    #allocation9 [shape = 'u8[8192]{0}', space=vmem, size = 0x2000, scoped, tag = 'output window, operand 1']
    #allocation10 [shape = 's32[2]{0}', space=sflag, size = 0x8, scoped, tag = 'scoped memory for tpu_custom_call.1']
    %10 = vsyncpa [#allocation3], 0
    %s11 = scalar_lea.sflag [#allocation3], 1
    %12 = vsyncpa %s11, 0
    %13 = vsyncpa [#allocation6], 0
    %s14 = scalar_lea.sflag [#allocation6], 1
    %15 = vsyncpa %s14, 0
    %16 = vsyncpa [#allocation4], 0
    %s17 = scalar_lea.sflag [#allocation4], 1
    %18 = vsyncpa %s17, 0
    %19 = vsyncpa [#allocation10], 0
    %s20 = scalar_lea.sflag [#allocation10], 1
    %21 = vsyncpa %s20, 0
    loop: start=0, step=1, limit=4
    $region2: #{tpu_custom_call.1} parent=1 // loop_pre_header
      _
    $region3: #{tpu_custom_call.1} parent=1 // loop_header
      %s23 = sphi 0, %s27
      %p24 = scmp.ge.s32.totalorder %s23, 4
      %s30 = sphi 0, %s42
      %s31 = sphi 0, %s38
      %s32 = sphi 0, %s30
      %s33 = sphi 0, %s31
      %s34 = sphi 0, %s32
      %s35 = sphi 0, %s33
      %s47 = sphi 0, %s49
      %s50 = sphi 0, %s47
      %s51 = sphi 0, %s50
      %s67 = sphi 0, %s51
      %s73 = sphi 0, %s75
      %s76 = sphi 0, %s73
      %s77 = sphi 0, %s76
      %s93 = sphi 0, %s77
      %s99 = sphi 0, %s101
      %s102 = sphi 0, %s99
      %s103 = sphi 0, %s102
      %s119 = sphi 0, %s103
      %s127 = sphi 0, %s129
      %s130 = sphi 0, %s127
      %s131 = sphi 0, %s130
      %s147 = sphi 0, %s131
      %s155 = sphi 0, %s157
      %s158 = sphi 0, %s155
      %s159 = sphi 0, %s158
      %s175 = sphi 0, %s159
    $region4: #{tpu_custom_call.1} parent=1 // loop_header_branch
      %26 = sbr.rel (%p24) target = $region8
    $region5: #{tpu_custom_call.1} parent=1 // loop_body
      %s28 = ssub.s32 %s23, 1
      %s29 = ssub.s32 %s23, 2
      %s36 = sadd.s32 1, %s31
      %p37 = scmp.ge.s32.totalorder %s36, 1
      %s38 = scalar_select %p37, 0, %s36
      %s39 = sadd.s32 1, %s30
      %s40 = scalar_select %p37, %s39, %s30
      %p41 = scmp.ge.s32.totalorder %s40, 2
      %s42 = scalar_select %p41, 0, %s40
      %s43 = ssub.s32 %s30, %s42
      %s44 = ssub.s32 %s31, %s38
      %s45 = sor.u32 %s43, %s44
      %p46 = scmp.eq.s32.totalorder %s45, 0
      %s48 = sadd.s32 %s47, 1
      %s49 = scalar_select %p46, %s47, %s48
      %p52 = pneg %p46
      %p53 = scmp.eq.s32.totalorder %s23, 1
      %p54 = por %p52, %p53
      %p55 = scmp.ne.s32.totalorder %s47, %s50
      %p56 = scmp.eq.s32.totalorder %s23, 0
      %p57 = por %p55, %p56
      %p58 = scmp.ne.s32.totalorder %s47, %s50
      %p59 = scmp.eq.s32.totalorder %s28, 1
      %p60 = por %p58, %p59
      %p61 = scmp.ne.s32.totalorder %s50, %s51
      %p62 = scmp.eq.s32.totalorder %s28, 0
      %p63 = por %p61, %p62
      %p64 = scmp.ne.s32.totalorder %s50, %s51
      %p65 = scmp.eq.s32.totalorder %s29, 1
      %p66 = por %p64, %p65
      %p68 = scmp.ne.s32.totalorder %s51, %s67
      %p69 = scmp.eq.s32.totalorder %s29, 0
      %p70 = por %p68, %p69
      %s71 = ssub.s32 %s30, %s42
      %p72 = scmp.eq.s32.totalorder %s71, 0
      %s74 = sadd.s32 %s73, 1
      %s75 = scalar_select %p72, %s73, %s74
      %p78 = pneg %p72
      %p79 = scmp.eq.s32.totalorder %s23, 1
      %p80 = por %p78, %p79
      %p81 = scmp.ne.s32.totalorder %s73, %s76
      %p82 = scmp.eq.s32.totalorder %s23, 0
      %p83 = por %p81, %p82
      %p84 = scmp.ne.s32.totalorder %s73, %s76
      %p85 = scmp.eq.s32.totalorder %s28, 1
      %p86 = por %p84, %p85
      %p87 = scmp.ne.s32.totalorder %s76, %s77
      %p88 = scmp.eq.s32.totalorder %s28, 0
      %p89 = por %p87, %p88
      %p90 = scmp.ne.s32.totalorder %s76, %s77
      %p91 = scmp.eq.s32.totalorder %s29, 1
      %p92 = por %p90, %p91
      %p94 = scmp.ne.s32.totalorder %s77, %s93
      %p95 = scmp.eq.s32.totalorder %s29, 0
      %p96 = por %p94, %p95
      %s97 = ssub.s32 %s30, %s42
      %p98 = scmp.eq.s32.totalorder %s97, 0
      %s100 = sadd.s32 %s99, 1
      %s101 = scalar_select %p98, %s99, %s100
      %p104 = pneg %p98
      %p105 = scmp.eq.s32.totalorder %s23, 1
      %p106 = por %p104, %p105
      %p107 = scmp.ne.s32.totalorder %s99, %s102
      %p108 = scmp.eq.s32.totalorder %s23, 0
      %p109 = por %p107, %p108
      %p110 = scmp.ne.s32.totalorder %s99, %s102
      %p111 = scmp.eq.s32.totalorder %s28, 1
      %p112 = por %p110, %p111
      %p113 = scmp.ne.s32.totalorder %s102, %s103
      %p114 = scmp.eq.s32.totalorder %s28, 0
      %p115 = por %p113, %p114
      %p116 = scmp.ne.s32.totalorder %s102, %s103
      %p117 = scmp.eq.s32.totalorder %s29, 1
      %p118 = por %p116, %p117
      %p120 = scmp.ne.s32.totalorder %s103, %s119
      %p121 = scmp.eq.s32.totalorder %s29, 0
      %p122 = por %p120, %p121
      %s123 = ssub.s32 %s30, %s42
      %s124 = ssub.s32 %s31, %s38
      %s125 = sor.u32 %s123, %s124
      %p126 = scmp.eq.s32.totalorder %s125, 0
      %s128 = sadd.s32 %s127, 1
      %s129 = scalar_select %p126, %s127, %s128
      %p132 = pneg %p126
      %p133 = scmp.eq.s32.totalorder %s23, 1
      %p134 = por %p132, %p133
      %p135 = scmp.ne.s32.totalorder %s127, %s130
      %p136 = scmp.eq.s32.totalorder %s23, 0
      %p137 = por %p135, %p136
      %p138 = scmp.ne.s32.totalorder %s127, %s130
      %p139 = scmp.eq.s32.totalorder %s28, 1
      %p140 = por %p138, %p139
      %p141 = scmp.ne.s32.totalorder %s130, %s131
      %p142 = scmp.eq.s32.totalorder %s28, 0
      %p143 = por %p141, %p142
      %p144 = scmp.ne.s32.totalorder %s130, %s131
      %p145 = scmp.eq.s32.totalorder %s29, 1
      %p146 = por %p144, %p145
      %p148 = scmp.ne.s32.totalorder %s131, %s147
      %p149 = scmp.eq.s32.totalorder %s29, 0
      %p150 = por %p148, %p149
      %s151 = ssub.s32 %s30, %s42
      %s152 = ssub.s32 %s31, %s38
      %s153 = sor.u32 %s151, %s152
      %p154 = scmp.eq.s32.totalorder %s153, 0
      %s156 = sadd.s32 %s155, 1
      %s157 = scalar_select %p154, %s155, %s156
      %p160 = pneg %p154
      %p161 = scmp.eq.s32.totalorder %s23, 1
      %p162 = por %p160, %p161
      %p163 = scmp.ne.s32.totalorder %s155, %s158
      %p164 = scmp.eq.s32.totalorder %s23, 0
      %p165 = por %p163, %p164
      %p166 = scmp.ne.s32.totalorder %s155, %s158
      %p167 = scmp.eq.s32.totalorder %s28, 1
      %p168 = por %p166, %p167
      %p169 = scmp.ne.s32.totalorder %s158, %s159
      %p170 = scmp.eq.s32.totalorder %s28, 0
      %p171 = por %p169, %p170
      %p172 = scmp.ne.s32.totalorder %s158, %s159
      %p173 = scmp.eq.s32.totalorder %s29, 1
      %p174 = por %p172, %p173
      %p176 = scmp.ne.s32.totalorder %s159, %s175
      %p177 = scmp.eq.s32.totalorder %s29, 0
      %p178 = por %p176, %p177
      %p179 = scmp.le.s32.totalorder 1, %s23
      %p180 = scmp.lt.s32.totalorder %s23, 3
      %p181 = pnand %p179, %p180
      %p182 = pneg %p181
      // Predicated region
      $region9: #{tpu_custom_call.1} parent=5 // pred_check
        _
      $region10: #{tpu_custom_call.1} parent=5 // pred_check_branch
        %184 = sbr.rel (%p181) target = $region12
      $region11: #{tpu_custom_call.1} parent=5 // pred_region
        %s185 = ssub.s32 %s23, 1
      $region12: #{tpu_custom_call.1} parent=5 // pred_fallthru
        _
      %p186 = scmp.lt.s32.totalorder %s23, 2
      // Predicated region
      $region13: #{tpu_custom_call.1} parent=5 // pred_check
        %p187 = pneg %p186
      $region14: #{tpu_custom_call.1} parent=5 // pred_check_branch
        %189 = sbr.rel (%p187) target = $region16
      $region15: #{tpu_custom_call.1} parent=5 // pred_region
        // Predicated region
        $region17: #{tpu_custom_call.1} parent=15 // pred_check
          %p190 = pneg %p57
        $region18: #{tpu_custom_call.1} parent=15 // pred_check_branch
          %192 = sbr.rel (%p190) target = $region20
        $region19: #{tpu_custom_call.1} parent=15 // pred_region
          %s193 = sand.u32 %s47, 1
          %s194 = scalar_lea.sflag [#allocation3], %s193
          %s195 = sand.u32 %s47, 1
          %s196 = smul.addr %s195, 8
          %s197 = scalar_lea.vmem [#allocation2], %s196
          %s199 = ssub.s32 128, 128
          %200 = vsyncadd %s194, %s199
          %s201 = sadd.s32 %s31, %s30
          %s202 = smul.addr %s201, 128
          %s203 = scalar_lea.hbm %s0, %s202
          %s205 = sshll.u32 %s197, 4
          %s206 = int_to_ptr.vmem [resolvable:$true] %s205
          %208 = dma.hbm_to_vmem [thread:$0]  %s203, 128, %s206, %s194
        $region20: #{tpu_custom_call.1} parent=15 // pred_fallthru
          _
        // Predicated region
        $region21: #{tpu_custom_call.1} parent=15 // pred_check
          %p209 = pneg %p83
        $region22: #{tpu_custom_call.1} parent=15 // pred_check_branch
          %211 = sbr.rel (%p209) target = $region24
        $region23: #{tpu_custom_call.1} parent=15 // pred_region
          %s212 = sand.u32 %s23, 1
          %s213 = scalar_lea.sflag [#allocation6], %s212
          %s214 = sand.u32 %s73, 1
          %s215 = smul.addr %s214, 8
          %s216 = scalar_lea.vmem [#allocation5], %s215
          %s218 = ssub.s32 128, 128
          %219 = vsyncadd %s213, %s218
          %s220 = smul.addr %s30, 128
          %s221 = scalar_lea.hbm %s1, %s220
          %s223 = sshll.u32 %s216, 4
          %s224 = int_to_ptr.vmem [resolvable:$true] %s223
          %226 = dma.hbm_to_vmem [thread:$0]  %s221, 128, %s224, %s213
        $region24: #{tpu_custom_call.1} parent=15 // pred_fallthru
          _
        // Predicated region
        $region25: #{tpu_custom_call.1} parent=15 // pred_check
          %p227 = pneg %p109
        $region26: #{tpu_custom_call.1} parent=15 // pred_check_branch
          %229 = sbr.rel (%p227) target = $region28
        $region27: #{tpu_custom_call.1} parent=15 // pred_region
          %s230 = sand.u32 %s23, 1
          %s231 = scalar_lea.sflag [#allocation6], %s230
          %s232 = sand.u32 %s99, 1
          %s233 = smul.addr %s232, 8
          %s234 = scalar_lea.vmem [#allocation7], %s233
          %s236 = ssub.s32 128, 128
          %237 = vsyncadd %s231, %s236
          %s238 = smul.addr %s30, 128
          %s239 = scalar_lea.hbm %s2, %s238
          %s241 = sshll.u32 %s234, 4
          %s242 = int_to_ptr.vmem [resolvable:$true] %s241
          %244 = dma.hbm_to_vmem [thread:$0]  %s239, 128, %s242, %s231
        $region28: #{tpu_custom_call.1} parent=15 // pred_fallthru
          _
      $region16: #{tpu_custom_call.1} parent=5 // pred_fallthru
        _
      %p245 = scmp.le.s32.totalorder 1, %s23
      %p246 = scmp.lt.s32.totalorder %s23, 3
      %p247 = pnand %p245, %p246
      %p248 = pneg %p247
      // Predicated region
      $region29: #{tpu_custom_call.1} parent=5 // pred_check
        _
      $region30: #{tpu_custom_call.1} parent=5 // pred_check_branch
        %250 = sbr.rel (%p247) target = $region32
      $region31: #{tpu_custom_call.1} parent=5 // pred_region
        %s251 = ssub.s32 %s23, 1
        %s252 = sand.u32 %s50, 1
        %s253 = scalar_lea.sflag [#allocation3], %s252
        %s254 = sand.u32 %s50, 1
        %s255 = smul.addr %s254, 8
        %s256 = scalar_lea.vmem [#allocation2], %s255
        // Predicated region
        $region33: #{tpu_custom_call.1} parent=31 // pred_check
          %p257 = pneg %p63
        $region34: #{tpu_custom_call.1} parent=31 // pred_check_branch
          %259 = sbr.rel (%p257) target = $region36
        $region35: #{tpu_custom_call.1} parent=31 // pred_region
          %260 = dma.done %s253, 128
        $region36: #{tpu_custom_call.1} parent=31 // pred_fallthru
          _
        %s261 = sand.u32 %s28, 1
        %s262 = scalar_lea.sflag [#allocation6], %s261
        %s263 = sand.u32 %s76, 1
        %s264 = smul.addr %s263, 8
        %s265 = scalar_lea.vmem [#allocation5], %s264
        // Predicated region
        $region37: #{tpu_custom_call.1} parent=31 // pred_check
          %p266 = pneg %p89
        $region38: #{tpu_custom_call.1} parent=31 // pred_check_branch
          %268 = sbr.rel (%p266) target = $region40
        $region39: #{tpu_custom_call.1} parent=31 // pred_region
          %269 = dma.done %s262, 128
        $region40: #{tpu_custom_call.1} parent=31 // pred_fallthru
          _
        %s270 = sand.u32 %s28, 1
        %s271 = scalar_lea.sflag [#allocation6], %s270
        %s272 = sand.u32 %s102, 1
        %s273 = smul.addr %s272, 8
        %s274 = scalar_lea.vmem [#allocation7], %s273
        // Predicated region
        $region41: #{tpu_custom_call.1} parent=31 // pred_check
          %p275 = pneg %p115
        $region42: #{tpu_custom_call.1} parent=31 // pred_check_branch
          %277 = sbr.rel (%p275) target = $region44
        $region43: #{tpu_custom_call.1} parent=31 // pred_region
          %278 = dma.done %s271, 128
        $region44: #{tpu_custom_call.1} parent=31 // pred_fallthru
          _
        %s279 = sand.u32 %s50, 1
        %s280 = scalar_lea.sflag [#allocation3], %s279
        %s281 = sand.u32 %s50, 1
        %s282 = smul.addr %s281, 8
        %s283 = scalar_lea.vmem [#allocation2], %s282
        %p284 = pneg %p63
        %p285 = pneg %p60
        %s286 = sand.u32 %s28, 1
        %s287 = scalar_lea.sflag [#allocation6], %s286
        %s288 = sand.u32 %s76, 1
        %s289 = smul.addr %s288, 8
        %s290 = scalar_lea.vmem [#allocation5], %s289
        %p291 = pneg %p89
        %p292 = pneg %p86
        %s293 = sand.u32 %s28, 1
        %s294 = scalar_lea.sflag [#allocation6], %s293
        %s295 = sand.u32 %s102, 1
        %s296 = smul.addr %s295, 8
        %s297 = scalar_lea.vmem [#allocation7], %s296
        %p298 = pneg %p115
        %p299 = pneg %p112
        %p300 = pneg %p143
        %p301 = pneg %p140
        %s302 = sand.u32 %s130, 1
        %s303 = scalar_lea.sflag [#allocation4], %s302
        %s304 = sand.u32 %s130, 1
        %s305 = smul.addr %s304, 8
        %s306 = scalar_lea.vmem [#allocation8], %s305
        %p307 = pneg %p171
        %p308 = pneg %p168
        %s309 = sand.u32 %s158, 1
        %s310 = scalar_lea.sflag [#allocation10], %s309
        %s311 = sand.u32 %s158, 1
        %s312 = smul.addr %s311, 8
        %s313 = scalar_lea.vmem [#allocation9], %s312
        %v314 = vld [vmem:[%s256] sm:$0xff]
        %v315 = vld [vmem:[%s265] sm:$0xff]
        %vm316 = vcmask 261120
        %v318 = vsel %vm316, %v314, 0
        %v321 = vsel %vm316, %v315, 0
        %323 = vmatprep.subr.mxu0 0.0
        %324 = vmatpush1.xpose.msra.mxu0 %v321
        %325 = vmatprep.subr.mxu0 0.0
        %326 = vmatpush1.xpose.msra.mxu0 0.0
        %327 = vmatprep.subr.mxu0 0.0
        %328 = vmatpush1.xpose.msra.mxu0 0.0
        %329 = vmatprep.subr.mxu0 0.0
        %330 = vmatpush1.xpose.msra.mxu0 0.0
        %331 = vmatprep.subr.mxu0 0.0
        %332 = vmatpush1.xpose.msra.mxu0 0.0
        %333 = vmatprep.subr.mxu0 0.0
        %334 = vmatpush1.xpose.msra.mxu0 0.0
        %335 = vmatprep.subr.mxu0 0.0
        %336 = vmatpush1.xpose.msra.mxu0 0.0
        %337 = vmatprep.subr.mxu0 0.0
        %338 = vmatpush1.xpose.msra.mxu0 0.0
        %339 = vmatprep.subr.mxu0 0.0
        %340 = vmatpush1.xpose.msra.mxu0 0.0
        %341 = vmatprep.subr.mxu0 0.0
        %342 = vmatpush1.xpose.msra.mxu0 0.0
        %343 = vmatprep.subr.mxu0 0.0
        %344 = vmatpush1.xpose.msra.mxu0 0.0
        %345 = vmatprep.subr.mxu0 0.0
        %346 = vmatpush1.xpose.msra.mxu0 0.0
        %347 = vmatprep.subr.mxu0 0.0
        %348 = vmatpush1.xpose.msra.mxu0 0.0
        %349 = vmatprep.subr.mxu0 0.0
        %350 = vmatpush1.xpose.msra.mxu0 0.0
        %351 = vmatprep.subr.mxu0 0.0
        %352 = vmatpush1.xpose.msra.mxu0 0.0
        %353 = vmatprep.subr.mxu0 0.0
        %354 = vmatpush1.xpose.msra.mxu0 0.0
        %355 = vmatprep.subr.mxu0 0.0
        %356 = vmatpush1.xpose.msra.mxu0 0.0
        %357 = vmatprep.subr.mxu0 0.0
        %358 = vmatpush1.xpose.msra.mxu0 0.0
        %359 = vmatprep.subr.mxu0 0.0
        %360 = vmatpush1.xpose.msra.mxu0 0.0
        %361 = vmatprep.subr.mxu0 0.0
        %362 = vmatpush1.xpose.msra.mxu0 0.0
        %363 = vmatprep.subr.mxu0 0.0
        %364 = vmatpush1.xpose.msra.mxu0 0.0
        %365 = vmatprep.subr.mxu0 0.0
        %366 = vmatpush1.xpose.msra.mxu0 0.0
        %367 = vmatprep.subr.mxu0 0.0
        %368 = vmatpush1.xpose.msra.mxu0 0.0
        %369 = vmatprep.subr.mxu0 0.0
        %370 = vmatpush1.xpose.msra.mxu0 0.0
        %371 = vmatprep.subr.mxu0 0.0
        %372 = vmatpush1.xpose.msra.mxu0 0.0
        %373 = vmatprep.subr.mxu0 0.0
        %374 = vmatpush1.xpose.msra.mxu0 0.0
        %375 = vmatprep.subr.mxu0 0.0
        %376 = vmatpush1.xpose.msra.mxu0 0.0
        %377 = vmatprep.subr.mxu0 0.0
        %378 = vmatpush1.xpose.msra.mxu0 0.0
        %379 = vmatprep.subr.mxu0 0.0
        %380 = vmatpush1.xpose.msra.mxu0 0.0
        %381 = vmatprep.subr.mxu0 0.0
        %382 = vmatpush1.xpose.msra.mxu0 0.0
        %383 = vmatprep.subr.mxu0 0.0
        %384 = vmatpush1.xpose.msra.mxu0 0.0
        %385 = vmatprep.subr.mxu0 0.0
        %386 = vmatpush1.xpose.msra.mxu0 0.0
        %387 = vmatprep.mubr.f32.mxu0 0.0
        %388 = vmatmul.mubr.f32.gmra.mrb[0].mxu0 %v318
        %v389 = vpop.f32.mrb[0].mxu0
        %v390 = vadd.f32 0.0, %v389
        %v391 = vpop.f32.mrb[0].mxu0
        %392 = vdwg.mxu0
        %v393 = vmul.f32 %v390, 0.17677669
        %vm394 = vcmask 64512
        %v395 = vsel %vm394, %v393, -inf
        %396 = vmax.xlane.f32.xlu0 %v395
        %v397 = vpop.xlane.xlu0 %396
        %v398 = vsub.f32 %v393, %v397
        %v399 = vmul.f32 %v398, 1.442695
        %v400 = vpow.pop %v399
        %v401 = vsel %vm394, %v400, 0.0
        %402 = vadd.xlane.f32.xlu0 %v401
        %v403 = vpop.xlane.xlu0 %402
        %v404 = vrcp.pop %v403
        %v405 = vmul.f32 1.0, %v404
        %v406 = vmul.f32 %v400, %v405
        %v407 = vld [vmem:[%s274] sm:$0xff]
        %v409 = vsel %vm394, %v406, 0
        %411 = vmatprep.subr.mxu0 0.0
        %412 = vmatpush1.msra.mxu0 %v407
        %413 = vmatprep.subr.mxu0 0.0
        %414 = vmatpush1.msra.mxu0 0.0
        %415 = vmatprep.subr.mxu0 0.0
        %416 = vmatpush1.msra.mxu0 0.0
        %417 = vmatprep.subr.mxu0 0.0
        %418 = vmatpush1.msra.mxu0 0.0
        %419 = vmatprep.subr.mxu0 0.0
        %420 = vmatpush1.msra.mxu0 0.0
        %421 = vmatprep.subr.mxu0 0.0
        %422 = vmatpush1.msra.mxu0 0.0
        %423 = vmatprep.subr.mxu0 0.0
        %424 = vmatpush1.msra.mxu0 0.0
        %425 = vmatprep.subr.mxu0 0.0
        %426 = vmatpush1.msra.mxu0 0.0
        %427 = vmatprep.subr.mxu0 0.0
        %428 = vmatpush1.msra.mxu0 0.0
        %429 = vmatprep.subr.mxu0 0.0
        %430 = vmatpush1.msra.mxu0 0.0
        %431 = vmatprep.subr.mxu0 0.0
        %432 = vmatpush1.msra.mxu0 0.0
        %433 = vmatprep.subr.mxu0 0.0
        %434 = vmatpush1.msra.mxu0 0.0
        %435 = vmatprep.subr.mxu0 0.0
        %436 = vmatpush1.msra.mxu0 0.0
        %437 = vmatprep.subr.mxu0 0.0
        %438 = vmatpush1.msra.mxu0 0.0
        %439 = vmatprep.subr.mxu0 0.0
        %440 = vmatpush1.msra.mxu0 0.0
        %441 = vmatprep.subr.mxu0 0.0
        %442 = vmatpush1.msra.mxu0 0.0
        %443 = vmatprep.subr.mxu0 0.0
        %444 = vmatpush1.msra.mxu0 0.0
        %445 = vmatprep.subr.mxu0 0.0
        %446 = vmatpush1.msra.mxu0 0.0
        %447 = vmatprep.subr.mxu0 0.0
        %448 = vmatpush1.msra.mxu0 0.0
        %449 = vmatprep.subr.mxu0 0.0
        %450 = vmatpush1.msra.mxu0 0.0
        %451 = vmatprep.subr.mxu0 0.0
        %452 = vmatpush1.msra.mxu0 0.0
        %453 = vmatprep.subr.mxu0 0.0
        %454 = vmatpush1.msra.mxu0 0.0
        %455 = vmatprep.subr.mxu0 0.0
        %456 = vmatpush1.msra.mxu0 0.0
        %457 = vmatprep.subr.mxu0 0.0
        %458 = vmatpush1.msra.mxu0 0.0
        %459 = vmatprep.subr.mxu0 0.0
        %460 = vmatpush1.msra.mxu0 0.0
        %461 = vmatprep.subr.mxu0 0.0
        %462 = vmatpush1.msra.mxu0 0.0
        %463 = vmatprep.subr.mxu0 0.0
        %464 = vmatpush1.msra.mxu0 0.0
        %465 = vmatprep.subr.mxu0 0.0
        %466 = vmatpush1.msra.mxu0 0.0
        %467 = vmatprep.subr.mxu0 0.0
        %468 = vmatpush1.msra.mxu0 0.0
        %469 = vmatprep.subr.mxu0 0.0
        %470 = vmatpush1.msra.mxu0 0.0
        %471 = vmatprep.subr.mxu0 0.0
        %472 = vmatpush1.msra.mxu0 0.0
        %473 = vmatprep.subr.mxu0 0.0
        %474 = vmatpush1.msra.mxu0 0.0
        %475 = vmatprep.mubr.f32.mxu0 0.0
        %476 = vmatmul.mubr.f32.gmra.mrb[0].mxu0 %v409
        %v477 = vpop.f32.mrb[0].mxu0
        %v478 = vadd.f32 0.0, %v477
        %v479 = vpop.f32.mrb[0].mxu0
        %480 = vdwg.mxu0
        %481 = vst.msk [vmem:[%s313] sm:$0xff] %vm394, %v406
        %482 = vst.msk [vmem:[%s306] sm:$0xff] %vm316, %v478
        %s483 = sand.u32 %s130, 1
        %s484 = scalar_lea.sflag [#allocation4], %s483
        %s485 = sand.u32 %s130, 1
        %s486 = smul.addr %s485, 8
        %s487 = scalar_lea.vmem [#allocation8], %s486
        %s488 = sand.u32 %s158, 1
        %s489 = scalar_lea.sflag [#allocation10], %s488
        %s490 = sand.u32 %s158, 1
        %s491 = smul.addr %s490, 8
        %s492 = scalar_lea.vmem [#allocation9], %s491
        // Predicated region
        $region45: #{tpu_custom_call.1} parent=31 // pred_check
          %p493 = pneg %p140
        $region46: #{tpu_custom_call.1} parent=31 // pred_check_branch
          %495 = sbr.rel (%p493) target = $region48
        $region47: #{tpu_custom_call.1} parent=31 // pred_region
          %s497 = ssub.s32 128, 128
          %498 = vsyncadd %s484, %s497
          %s499 = sadd.s32 %s33, %s32
          %s500 = smul.addr %s499, 128
          %s501 = scalar_lea.hbm %s3, %s500
          %s503 = sshll.u32 %s487, 4
          %s504 = int_to_ptr.vmem [resolvable:$true] %s503
          %506 = dma.vmem_to_hbm [thread:$0]  %s504, 128, %s501, %s484
        $region48: #{tpu_custom_call.1} parent=31 // pred_fallthru
          _
        // Predicated region
        $region49: #{tpu_custom_call.1} parent=31 // pred_check
          %p507 = pneg %p168
        $region50: #{tpu_custom_call.1} parent=31 // pred_check_branch
          %509 = sbr.rel (%p507) target = $region52
        $region51: #{tpu_custom_call.1} parent=31 // pred_region
          %s511 = ssub.s32 128, 128
          %512 = vsyncadd %s489, %s511
          %s513 = sadd.s32 %s33, %s32
          %s514 = smul.addr %s513, 128
          %s515 = scalar_lea.hbm %s4, %s514
          %s517 = sshll.u32 %s492, 4
          %s518 = int_to_ptr.vmem [resolvable:$true] %s517
          %520 = dma.vmem_to_hbm [thread:$0]  %s518, 128, %s515, %s489
        $region52: #{tpu_custom_call.1} parent=31 // pred_fallthru
          _
      $region32: #{tpu_custom_call.1} parent=5 // pred_fallthru
        _
      %p521 = scmp.le.s32.totalorder 2, %s23
      // Predicated region
      $region53: #{tpu_custom_call.1} parent=5 // pred_check
        %p522 = pneg %p521
      $region54: #{tpu_custom_call.1} parent=5 // pred_check_branch
        %524 = sbr.rel (%p522) target = $region56
      $region55: #{tpu_custom_call.1} parent=5 // pred_region
        %s525 = ssub.s32 %s23, 2
        // Predicated region
        $region57: #{tpu_custom_call.1} parent=55 // pred_check
          %p526 = pneg %p146
        $region58: #{tpu_custom_call.1} parent=55 // pred_check_branch
          %528 = sbr.rel (%p526) target = $region60
        $region59: #{tpu_custom_call.1} parent=55 // pred_region
          %s529 = sand.u32 %s131, 1
          %s530 = scalar_lea.sflag [#allocation4], %s529
          %s531 = sand.u32 %s131, 1
          %s532 = smul.addr %s531, 8
          %s533 = scalar_lea.vmem [#allocation8], %s532
          %534 = dma.done %s530, 128
        $region60: #{tpu_custom_call.1} parent=55 // pred_fallthru
          _
        // Predicated region
        $region61: #{tpu_custom_call.1} parent=55 // pred_check
          %p535 = pneg %p174
        $region62: #{tpu_custom_call.1} parent=55 // pred_check_branch
          %537 = sbr.rel (%p535) target = $region64
        $region63: #{tpu_custom_call.1} parent=55 // pred_region
          %s538 = sand.u32 %s159, 1
          %s539 = scalar_lea.sflag [#allocation10], %s538
          %s540 = sand.u32 %s159, 1
          %s541 = smul.addr %s540, 8
          %s542 = scalar_lea.vmem [#allocation9], %s541
          %543 = dma.done %s539, 128
        $region64: #{tpu_custom_call.1} parent=55 // pred_fallthru
          _
      $region56: #{tpu_custom_call.1} parent=5 // pred_fallthru
        _
    $region6: #{tpu_custom_call.1} parent=1 // loop_footer
      %s27 = sadd.s32 1, %s23
    $region7: #{tpu_custom_call.1} parent=1 // loop_footer_branch
      %22 = sbr.rel target = $region3
    $region8: #{tpu_custom_call.1} parent=1 // loop_exit
      _
    %544 = vsyncpa [#allocation3], 1
    %s545 = scalar_lea.sflag [#allocation3], 1
    %546 = vsyncpa %s545, 1
    %547 = vsyncpa [#allocation6], 1
    %s548 = scalar_lea.sflag [#allocation6], 1
    %549 = vsyncpa %s548, 1
    %550 = vsyncpa [#allocation4], 1
    %s551 = scalar_lea.sflag [#allocation4], 1
    %552 = vsyncpa %s551, 1
    %553 = vsyncpa [#allocation10], 1
    %s554 = scalar_lea.sflag [#allocation10], 1
    %555 = vsyncpa %s554, 1

</llo_original>
